<compile_context>
chip_gen: v6e
topology: v6e:2x2x1
jax: 0.10.0
libtpu: 0.0.40
codegen_flags: <defaults>
</compile_context>

<pallas_src>
import math

import jax
import jax.numpy as jnp
from jax import lax
from jax.experimental import pallas as pl
from jax.experimental.pallas import tpu as pltpu


def _gelu_exact(x):
    # PyTorch nn.GELU() default: exact erf formulation.
    return 0.5 * x * (1.0 + lax.erf(x / math.sqrt(2.0)))


def _round_up(x, m):
    return (x + m - 1) // m * m


def _pad2d(a, rows, cols):
    pr, pc = rows - a.shape[0], cols - a.shape[1]
    if pr or pc:
        a = jnp.pad(a, ((0, pr), (0, pc)))
    return a


def _vmem_capacity_bytes():
    """Per-TensorCore VMEM capacity; conservative (v7x-sized) fallback."""
    try:
        info = pltpu.get_tpu_info()
        cap = getattr(info, "vmem_capacity_bytes", None)
        if cap:
            return int(cap)
    except Exception:
        pass
    return 64 * 1024 * 1024


def _pick_tile_m(M_s, sublane, fits):
    """Pick an M tile: largest standard tile that fits the VMEM budget with
    low padded-row waste; falls back to min-waste.  M_s is sublane-rounded."""
    if M_s <= 128:
        return M_s  # single small tile; already a multiple of `sublane`
    cands = [t for t in (1024, 512, 256, 128) if t <= M_s]
    fitting = [t for t in cands if fits(t)]
    if not fitting:
        return 128

    def waste(t):
        return _round_up(M_s, t) - M_s

    # Prefer the largest tile whose padded-row waste is <= 12.5% of M_p
    # (bigger tile_m => fewer weight/accumulator passes); otherwise minimize
    # the number of garbage rows fed to the MXU.
    good = [t for t in fitting if waste(t) * 8 <= _round_up(M_s, t)]
    if good:
        return max(good)
    return min(fitting, key=lambda t: (waste(t), -t))


# ---------------------------------------------------------------------------
# Kernels
# ---------------------------------------------------------------------------

def _mlp_resident_kernel(x_ref, w1_ref, b1_ref, w2_ref, b2_ref, o_ref):
    """Weights fully resident in VMEM; grid = (M_tiles,)."""
    h = jnp.dot(x_ref[...], w1_ref[...], preferred_element_type=jnp.float32)
    h = _gelu_exact(h + b1_ref[...].astype(jnp.float32))
    # dropout(p=0.0) == identity -> no-op
    out = jnp.dot(h.astype(w2_ref.dtype), w2_ref[...],
                  preferred_element_type=jnp.float32)
    o_ref[...] = (out + b2_ref[...].astype(jnp.float32)).astype(o_ref.dtype)


def _make_mlp_htiled_kernel(use_scratch):
    """Hidden dim streamed in tiles; grid = (M_tiles, H_tiles), H last."""

    def kernel(x_ref, w1_ref, b1_ref, w2_ref, b2_ref, o_ref, *scratch):
        acc_ref = scratch[0] if use_scratch else o_ref
        j = pl.program_id(1)

        h = jnp.dot(x_ref[...], w1_ref[...], preferred_element_type=jnp.float32)
        h = _gelu_exact(h + b1_ref[...].astype(jnp.float32))

        # Fold b2 into the accumulator init on the first H step.
        @pl.when(j == 0)
        def _():
            acc_ref[...] = jnp.broadcast_to(
                b2_ref[...].astype(jnp.float32), acc_ref.shape)

        acc_ref[...] += jnp.dot(h.astype(w2_ref.dtype), w2_ref[...],
                                preferred_element_type=jnp.float32)

        if use_scratch:
            @pl.when(j == pl.num_programs(1) - 1)
            def _():
                o_ref[...] = acc_ref[...].astype(o_ref.dtype)

    return kernel


# ---------------------------------------------------------------------------
# Wrapper
# ---------------------------------------------------------------------------

def mlp_pallas(x, w1, b1, w2, b2, *, weights_resident=None, max_tile_h=None):
    """x: (M, C_in); w1: (C_in, H); b1: (H,); w2: (H, C_out); b2: (C_out,).

    Zero-pads rows/features to TPU-friendly multiples (exact: GELU(0)=0 and
    zero w2 rows contribute nothing) and slices the result.
    """
    M, C_in = x.shape
    H = w1.shape[1]
    C_out = w2.shape[1]

    in_dtype = x.dtype
    out_dtype = x.dtype
    in_bytes = jnp.dtype(in_dtype).itemsize
    out_bytes = jnp.dtype(out_dtype).itemsize
    # Dtype-aware sublane rounding (8 rows f32, 16 rows bf16, 32 rows int8/fp8).
    sublane = {4: 8, 2: 16, 1: 32}.get(in_bytes, 8)

    # Lane-dense feature padding (multiples of 128).
    C_in_p = _round_up(C_in, 128)
    H_p = _round_up(H, 128)
    C_out_p = _round_up(C_out, 128)
    M_s = _round_up(M, sublane)

    # Per-generation VMEM budget: ~80% of capacity as the compiler limit,
    # ~90% of that as our own tile budget (double-buffering headroom).
    cap = _vmem_capacity_bytes()
    vmem_limit = min(int(cap * 0.80), cap - 4 * 1024 * 1024)
    budget = int(vmem_limit * 0.90)

    def resident_bytes(tm):
        return (2 * tm * C_in_p * in_bytes          # x (double-buffered)
                + 2 * C_in_p * H_p * in_bytes       # w1 (2x: buffer headroom)
                + 2 * H_p * C_out_p * in_bytes      # w2
                + 2 * (H_p + C_out_p) * 4           # biases
                + 2 * tm * C_out_p * out_bytes      # out (double-buffered)
                + tm * H_p * 4                      # f32 GELU intermediate
                + tm * C_out_p * 4)                 # f32 fc2 result pre-cast

    if weights_resident is None:
        min_tm = _round_up(min(M_s, 128), sublane)
        weights_resident = resident_bytes(min_tm) <= budget

    if weights_resident:
        # ------------------ weights-resident mode: grid = (M_tiles,) -------
        tile_m = _pick_tile_m(M_s, sublane,
                              lambda t: resident_bytes(t) <= budget)
        M_p = _round_up(M_s, tile_m)
        H_final = H_p
        grid = (M_p // tile_m,)

        in_specs = [
            pl.BlockSpec((tile_m, C_in_p), lambda i: (i, 0)),   # x tile
            pl.BlockSpec((C_in_p, H_final), lambda i: (0, 0)),  # w1 (resident)
            pl.BlockSpec((1, H_final), lambda i: (0, 0)),       # b1 (resident)
            pl.BlockSpec((H_final, C_out_p), lambda i: (0, 0)),  # w2 (resident)
            pl.BlockSpec((1, C_out_p), lambda i: (0, 0)),       # b2 (resident)
        ]
        out_specs = pl.BlockSpec((tile_m, C_out_p), lambda i: (i, 0))
        scratch_shapes = []
        kernel = _mlp_resident_kernel
        dim_sem = ("parallel",)
    else:
        # ------------------ H-tiled mode: grid = (M_tiles, H_tiles) --------
        use_scratch = jnp.dtype(out_dtype) != jnp.dtype(jnp.float32)

        def htiled_bytes(tm, th):
            return (2 * tm * C_in_p * in_bytes
                    + 2 * C_in_p * th * in_bytes
                    + 2 * th * C_out_p * in_bytes
                    + 2 * (th + C_out_p) * 4
                    + 2 * tm * C_out_p * out_bytes
                    + (tm * C_out_p * 4 if use_scratch else 0)
                    + tm * th * 4
                    + tm * C_out_p * 4)

        th_cands = [t for t in (2048, 1024, 512, 256, 128) if t <= H_p]
        if max_tile_h is not None:
            th_cands = [t for t in th_cands if t <= max_tile_h] or [128]
        if not th_cands:
            th_cands = [128]

        th_min = th_cands[-1]
        # tile_m is the bigger lever (weights stream once per M tile).
        tile_m = _pick_tile_m(M_s, sublane,
                              lambda t: htiled_bytes(t, th_min) <= budget)
        tile_h = th_min
        for th in th_cands:  # descending: take the largest that still fits
            if htiled_bytes(tile_m, th) <= budget:
                tile_h = th
                break

        M_p = _round_up(M_s, tile_m)
        H_final = _round_up(H_p, tile_h)
        grid = (M_p // tile_m, H_final // tile_h)

        in_specs = [
            pl.BlockSpec((tile_m, C_in_p), lambda i, j: (i, 0)),   # x tile
            pl.BlockSpec((C_in_p, tile_h), lambda i, j: (0, j)),   # w1 slice
            pl.BlockSpec((1, tile_h), lambda i, j: (0, j)),        # b1 slice
            pl.BlockSpec((tile_h, C_out_p), lambda i, j: (j, 0)),  # w2 slice
            pl.BlockSpec((1, C_out_p), lambda i, j: (0, 0)),       # b2
        ]
        out_specs = pl.BlockSpec((tile_m, C_out_p), lambda i, j: (i, 0))
        scratch_shapes = (
            [pltpu.VMEM((tile_m, C_out_p), jnp.float32)] if use_scratch else [])
        kernel = _make_mlp_htiled_kernel(use_scratch)
        dim_sem = ("parallel", "arbitrary")

    x_p = _pad2d(x, M_p, C_in_p)
    w1_p = _pad2d(w1, C_in_p, H_final)
    w2_p = _pad2d(w2, H_final, C_out_p)
    b1_p = _pad2d(b1.reshape(1, -1), 1, H_final)
    b2_p = _pad2d(b2.reshape(1, -1), 1, C_out_p)

    out_p = pl.pallas_call(
        kernel,
        out_shape=jax.ShapeDtypeStruct((M_p, C_out_p), out_dtype),
        grid_spec=pltpu.PrefetchScalarGridSpec(
            num_scalar_prefetch=0,
            grid=grid,
            in_specs=in_specs,
            out_specs=out_specs,
            scratch_shapes=scratch_shapes,
        ),
        compiler_params=pltpu.CompilerParams(
            dimension_semantics=dim_sem,
            vmem_limit_bytes=int(vmem_limit),
        ),
    )(x_p, w1_p, b1_p, w2_p, b2_p)

    return out_p[:M, :C_out]


# ---------------------------------------------------------------------------
# Demo / correctness check
# ---------------------------------------------------------------------------

if __name__ == "__main__":
    key = jax.random.PRNGKey(0)

    def make_params(key, cin, hid, cout):
        kx, kw1, kb1, kw2, kb2 = jax.random.split(key, 5)
        bound1 = 1.0 / math.sqrt(cin)
        bound2 = 1.0 / math.sqrt(hid)
        w1 = jax.random.uniform(kw1, (cin, hid), minval=-bound1, maxval=bound1,
                                dtype=jnp.float32)
        b1 = jax.random.uniform(kb1, (hid,), minval=-bound1, maxval=bound1,
                                dtype=jnp.float32)
        w2 = jax.random.uniform(kw2, (hid, cout), minval=-bound2, maxval=bound2,
                                dtype=jnp.float32)
        b2 = jax.random.uniform(kb2, (cout,), minval=-bound2, maxval=bound2,
                                dtype=jnp.float32)
        return kx, w1, b1, w2, b2

    def ref_mlp(x2d, w1, b1, w2, b2):
        return _gelu_exact(x2d @ w1 + b1) @ w2 + b2

    # --- 1) f32, auto mode (weights-resident), small ViT-like shape ---------
    B, N, Cin, Hid, Cout = 2, 8, 16, 32, 16
    k1, w1, b1, w2, b2 = make_params(key, Cin, Hid, Cout)
    x = jax.random.normal(k1, (B, N, Cin), dtype=jnp.float32)
    x2d = x.reshape(B * N, Cin)
    ref = ref_mlp(x2d, w1, b1, w2, b2)

    out = mlp_pallas(x2d, w1, b1, w2, b2)
    jax.block_until_ready(out)
    assert jnp.allclose(out, ref, atol=1e-5, rtol=1e-5), "f32 resident mismatch"
    out3d = out.reshape(B, N, Cout)  # module-shaped output

    # --- 2) f32, forced H-tiled (streaming-weights) path, odd shapes --------
    B2, N2, Cin2, Hid2, Cout2 = 2, 9, 24, 200, 40
    k2, w1b, b1b, w2b, b2b = make_params(jax.random.PRNGKey(1), Cin2, Hid2, Cout2)
    xb = jax.random.normal(k2, (B2, N2, Cin2), dtype=jnp.float32)
    xb2d = xb.reshape(B2 * N2, Cin2)
    refb = ref_mlp(xb2d, w1b, b1b, w2b, b2b)

    outb = mlp_pallas(xb2d, w1b, b1b, w2b, b2b,
                      weights_resident=False, max_tile_h=128)
    jax.block_until_ready(outb)
    assert jnp.allclose(outb, refb, atol=1e-5, rtol=1e-5), "f32 H-tiled mismatch"

    # --- 3) bf16 operands (f32 MXU accumulation), relaxed tolerance ---------
    out_bf16 = mlp_pallas(x2d.astype(jnp.bfloat16),
                          w1.astype(jnp.bfloat16), b1,
                          w2.astype(jnp.bfloat16), b2)
    jax.block_until_ready(out_bf16)
    assert jnp.allclose(out_bf16.astype(jnp.float32), ref,
                        atol=3e-2, rtol=3e-2), "bf16 resident mismatch"

    print("KERNEL_OK")
</pallas_src>

<mosaic_0001>
module attributes {stable_mosaic.version = 11 : i64} {
  func.func @_mlp_resident_kernel(%arg0: i32, %arg1: memref<16x128xf32, #tpu.memory_space<vmem>>, %arg2: memref<128x128xf32, #tpu.memory_space<vmem>>, %arg3: memref<1x128xf32, #tpu.memory_space<vmem>>, %arg4: memref<128x128xf32, #tpu.memory_space<vmem>>, %arg5: memref<1x128xf32, #tpu.memory_space<vmem>>, %arg6: memref<16x128xf32, #tpu.memory_space<vmem>>) attributes {dimension_semantics = [#tpu.dimension_semantics<parallel>], iteration_bounds = array<i64: 1>, scalar_prefetch = 0 : i64, scratch_operands = 0 : i64, tpu.core_type = #tpu.core_type<tc>, window_params = [{transform_indices = @transform_0, window_bounds = array<i64: 16, 128>}, {pipeline_mode = #tpu.pipeline_mode<synchronous>, transform_indices = @transform_1, window_bounds = array<i64: 128, 128>}, {pipeline_mode = #tpu.pipeline_mode<synchronous>, transform_indices = @transform_2, window_bounds = array<i64: 1, 128>}, {pipeline_mode = #tpu.pipeline_mode<synchronous>, transform_indices = @transform_3, window_bounds = array<i64: 128, 128>}, {pipeline_mode = #tpu.pipeline_mode<synchronous>, transform_indices = @transform_4, window_bounds = array<i64: 1, 128>}, {transform_indices = @transform_5, window_bounds = array<i64: 16, 128>}]} {
    %c0 = arith.constant 0 : index
    %c0_0 = arith.constant 0 : index
    %0 = vector.load %arg1[%c0, %c0_0] : memref<16x128xf32, #tpu.memory_space<vmem>>, vector<16x128xf32>
    %c0_1 = arith.constant 0 : index
    %c0_2 = arith.constant 0 : index
    %1 = vector.load %arg2[%c0_1, %c0_2] : memref<128x128xf32, #tpu.memory_space<vmem>>, vector<128x128xf32>
    %cst = arith.constant dense<0.000000e+00> : vector<16x128xf32>
    %2 = tpu.matmul %0, %1, %cst {dimension_numbers = #tpu.dot_dimension_numbers<[1], [0], [0], [1], [0, 0, 1, 1], [], []>} : vector<16x128xf32>, vector<128x128xf32>, vector<16x128xf32> -> vector<16x128xf32>
    %c0_3 = arith.constant 0 : index
    %c0_4 = arith.constant 0 : index
    %3 = vector.load %arg3[%c0_3, %c0_4] : memref<1x128xf32, #tpu.memory_space<vmem>>, vector<1x128xf32>
    %4 = vector.broadcast %3 : vector<1x128xf32> to vector<16x128xf32>
    %5 = arith.addf %2, %4 : vector<16x128xf32>
    %cst_5 = arith.constant 5.000000e-01 : f32
    %6 = vector.broadcast %cst_5 : f32 to vector<16x128xf32>
    %7 = arith.mulf %6, %5 : vector<16x128xf32>
    %cst_6 = arith.constant 1.41421354 : f32
    %8 = vector.broadcast %cst_6 : f32 to vector<16x128xf32>
    %9 = arith.divf %5, %8 : vector<16x128xf32>
    %10 = math.erf %9 : vector<16x128xf32>
    %cst_7 = arith.constant 1.000000e+00 : f32
    %11 = vector.broadcast %cst_7 : f32 to vector<16x128xf32>
    %12 = arith.addf %11, %10 : vector<16x128xf32>
    %13 = arith.mulf %7, %12 : vector<16x128xf32>
    %c0_8 = arith.constant 0 : index
    %c0_9 = arith.constant 0 : index
    %14 = vector.load %arg4[%c0_8, %c0_9] : memref<128x128xf32, #tpu.memory_space<vmem>>, vector<128x128xf32>
    %cst_10 = arith.constant dense<0.000000e+00> : vector<16x128xf32>
    %15 = tpu.matmul %13, %14, %cst_10 {dimension_numbers = #tpu.dot_dimension_numbers<[1], [0], [0], [1], [0, 0, 1, 1], [], []>} : vector<16x128xf32>, vector<128x128xf32>, vector<16x128xf32> -> vector<16x128xf32>
    %c0_11 = arith.constant 0 : index
    %c0_12 = arith.constant 0 : index
    %16 = vector.load %arg5[%c0_11, %c0_12] : memref<1x128xf32, #tpu.memory_space<vmem>>, vector<1x128xf32>
    %17 = vector.broadcast %16 : vector<1x128xf32> to vector<16x128xf32>
    %18 = arith.addf %15, %17 : vector<16x128xf32>
    %c0_13 = arith.constant 0 : index
    %c0_14 = arith.constant 0 : index
    %19 = vector.load %arg6[%c0_13, %c0_14] : memref<16x128xf32, #tpu.memory_space<vmem>>, vector<16x128xf32>
    tpu.vector_store %arg6[%c0_13, %c0_14], %18 {strides = array<i32>} : memref<16x128xf32, #tpu.memory_space<vmem>>, vector<16x128xf32>,
    return
  }
  func.func @transform_0(%arg0: i32) -> (i32, i32) {
    %c0_i32 = arith.constant 0 : i32
    %c0_i32_0 = arith.constant 0 : i32
    return %arg0, %c0_i32 : i32, i32
  }
  func.func @transform_1(%arg0: i32) -> (i32, i32) {
    %c0_i32 = arith.constant 0 : i32
    %c0_i32_0 = arith.constant 0 : i32
    %c0_i32_1 = arith.constant 0 : i32
    return %c0_i32, %c0_i32_0 : i32, i32
  }
  func.func @transform_2(%arg0: i32) -> (i32, i32) {
    %c0_i32 = arith.constant 0 : i32
    %c0_i32_0 = arith.constant 0 : i32
    %c0_i32_1 = arith.constant 0 : i32
    return %c0_i32, %c0_i32_0 : i32, i32
  }
  func.func @transform_3(%arg0: i32) -> (i32, i32) {
    %c0_i32 = arith.constant 0 : i32
    %c0_i32_0 = arith.constant 0 : i32
    %c0_i32_1 = arith.constant 0 : i32
    return %c0_i32, %c0_i32_0 : i32, i32
  }
  func.func @transform_4(%arg0: i32) -> (i32, i32) {
    %c0_i32 = arith.constant 0 : i32
    %c0_i32_0 = arith.constant 0 : i32
    %c0_i32_1 = arith.constant 0 : i32
    return %c0_i32, %c0_i32_0 : i32, i32
  }
  func.func @transform_5(%arg0: i32) -> (i32, i32) {
    %c0_i32 = arith.constant 0 : i32
    %c0_i32_0 = arith.constant 0 : i32
    return %arg0, %c0_i32 : i32, i32
  }
}

</mosaic_0001>

<llo_original>
// kernel: tpu_custom_call.1
$region0: #{tpu_custom_call.1}
  #allocation0 [shape = 'u32[]', space=smem, size = 0x4, offset = 0x4, fixed_abs, tag = 'smem constant byte address 0x4 - core index']
  #allocation1 [shape = 'u32[144,128]{1,0:T(1,128)}', space=vmem, size = 0x12000, scoped, tag = 'internal scratch']
  %s0 = inlined_call_operand.hbm [shape: f32[16,128], index: 0, kind: input, shape index: {}]
  %s1 = inlined_call_operand.hbm [shape: f32[128,128], index: 1, kind: input, shape index: {}]
  %s2 = inlined_call_operand.vmem [shape: f32[1,128], index: 2, kind: input, shape index: {}]
  %s3 = inlined_call_operand.hbm [shape: f32[128,128], index: 3, kind: input, shape index: {}]
  %s4 = inlined_call_operand.vmem [shape: f32[1,128], index: 4, kind: input, shape index: {}]
  %s5 = inlined_call_operand.hbm [shape: f32[16,128], index: 5, kind: output, shape index: {}]
  %s6 = sld [smem:[#allocation0]]
  $region42: #{tpu_custom_call.1} parent=0
    _
  %s8 = ssub.s32 1, %s6
  %s9 = scalar_select 0, %s8, %s6
  $region1: #{tpu_custom_call.1} parent=0
    #allocation2 [shape = 'u8[8192]{0}', space=vmem, size = 0x2000, scoped, tag = 'input window, operand 0, single buffered']
    #allocation3 [shape = 's32[1]{0}', space=sflag, size = 0x4, scoped, tag = 'scoped memory for tpu_custom_call.1']
    #allocation4 [shape = 's32[1]{0}', space=sflag, size = 0x4, scoped, tag = 'scoped memory for tpu_custom_call.1']
    #allocation5 [shape = 'u8[65536]{0}', space=vmem, size = 0x10000, scoped, tag = 'input window, operand 1, single buffered']
    #allocation6 [shape = 's32[1]{0}', space=sflag, size = 0x4, scoped, tag = 'scoped memory for tpu_custom_call.1']
    #allocation7 [shape = 'u8[65536]{0}', space=vmem, size = 0x10000, scoped, tag = 'input window, operand 3, single buffered']
    #allocation8 [shape = 'u8[8192]{0}', space=vmem, size = 0x2000, scoped, tag = 'output window, operand 0, single buffered']
    %10 = vsyncpa [#allocation3], 0
    %11 = vsyncpa [#allocation6], 0
    %12 = vsyncpa [#allocation4], 0
    // Predicated region
    $region2: #{tpu_custom_call.1} parent=1 // pred_check
      _
    $region3: #{tpu_custom_call.1} parent=1 // pred_check_branch
      %14 = sbr.rel (0) target = $region5
    $region4: #{tpu_custom_call.1} parent=1 // pred_region
      %s16 = ssub.s32 256, 256
      %17 = vsyncadd [#allocation3], %s16
      %s18 = sshll.u32 [#allocation2], 4
      %s19 = int_to_ptr.vmem [resolvable:$true] %s18
      %24 = dma.hbm_to_vmem [thread:$0]  %s0, 256, %s19, [#allocation3], 128, 128, 8
    $region5: #{tpu_custom_call.1} parent=1 // pred_fallthru
      _
    // Predicated region
    $region6: #{tpu_custom_call.1} parent=1 // pred_check
      _
    $region7: #{tpu_custom_call.1} parent=1 // pred_check_branch
      %26 = sbr.rel (0) target = $region9
    $region8: #{tpu_custom_call.1} parent=1 // pred_region
      %s28 = ssub.s32 2048, 2048
      %29 = vsyncadd [#allocation6], %s28
      %s30 = sshll.u32 [#allocation5], 4
      %s31 = int_to_ptr.vmem [resolvable:$true] %s30
      %36 = dma.hbm_to_vmem [thread:$0]  %s1, 2048, %s31, [#allocation6], 128, 128, 8
    $region9: #{tpu_custom_call.1} parent=1 // pred_fallthru
      _
    // Predicated region
    $region10: #{tpu_custom_call.1} parent=1 // pred_check
      _
    $region11: #{tpu_custom_call.1} parent=1 // pred_check_branch
      %38 = sbr.rel (0) target = $region13
    $region12: #{tpu_custom_call.1} parent=1 // pred_region
      _
    $region13: #{tpu_custom_call.1} parent=1 // pred_fallthru
      _
    // Predicated region
    $region14: #{tpu_custom_call.1} parent=1 // pred_check
      _
    $region15: #{tpu_custom_call.1} parent=1 // pred_check_branch
      %40 = sbr.rel (0) target = $region17
    $region16: #{tpu_custom_call.1} parent=1 // pred_region
      %s42 = ssub.s32 2048, 2048
      %43 = vsyncadd [#allocation6], %s42
      %s44 = sshll.u32 [#allocation7], 4
      %s45 = int_to_ptr.vmem [resolvable:$true] %s44
      %50 = dma.hbm_to_vmem [thread:$0]  %s3, 2048, %s45, [#allocation6], 128, 128, 8
    $region17: #{tpu_custom_call.1} parent=1 // pred_fallthru
      _
    // Predicated region
    $region18: #{tpu_custom_call.1} parent=1 // pred_check
      _
    $region19: #{tpu_custom_call.1} parent=1 // pred_check_branch
      %52 = sbr.rel (0) target = $region21
    $region20: #{tpu_custom_call.1} parent=1 // pred_region
      _
    $region21: #{tpu_custom_call.1} parent=1 // pred_fallthru
      _
    // Predicated region
    $region22: #{tpu_custom_call.1} parent=1 // pred_check
      _
    $region23: #{tpu_custom_call.1} parent=1 // pred_check_branch
      %54 = sbr.rel (0) target = $region25
    $region24: #{tpu_custom_call.1} parent=1 // pred_region
      %55 = dma.done [#allocation3], 256
    $region25: #{tpu_custom_call.1} parent=1 // pred_fallthru
      _
    // Predicated region
    $region26: #{tpu_custom_call.1} parent=1 // pred_check
      _
    $region27: #{tpu_custom_call.1} parent=1 // pred_check_branch
      %57 = sbr.rel (0) target = $region29
    $region28: #{tpu_custom_call.1} parent=1 // pred_region
      %58 = dma.done [#allocation6], 2048
    $region29: #{tpu_custom_call.1} parent=1 // pred_fallthru
      _
    // Predicated region
    $region30: #{tpu_custom_call.1} parent=1 // pred_check
      _
    $region31: #{tpu_custom_call.1} parent=1 // pred_check_branch
      %60 = sbr.rel (0) target = $region33
    $region32: #{tpu_custom_call.1} parent=1 // pred_region
      %61 = dma.done [#allocation6], 2048
    $region33: #{tpu_custom_call.1} parent=1 // pred_fallthru
      _
    %v62 = vld [vmem:[#allocation2] sm:$0xff]
    %v63 = vld [vmem:[#allocation2 + $0x8] sm:$0xff]
    %v64 = vld [vmem:[#allocation5] sm:$0xff]
    %v65 = vld [vmem:[#allocation5 + $0x8] sm:$0xff]
    %v66 = vld [vmem:[#allocation5 + $0x10] sm:$0xff]
    %v67 = vld [vmem:[#allocation5 + $0x18] sm:$0xff]
    %v68 = vld [vmem:[#allocation5 + $0x20] sm:$0xff]
    %v69 = vld [vmem:[#allocation5 + $0x28] sm:$0xff]
    %v70 = vld [vmem:[#allocation5 + $0x30] sm:$0xff]
    %v71 = vld [vmem:[#allocation5 + $0x38] sm:$0xff]
    %v72 = vld [vmem:[#allocation5 + $0x40] sm:$0xff]
    %v73 = vld [vmem:[#allocation5 + $0x48] sm:$0xff]
    %v74 = vld [vmem:[#allocation5 + $0x50] sm:$0xff]
    %v75 = vld [vmem:[#allocation5 + $0x58] sm:$0xff]
    %v76 = vld [vmem:[#allocation5 + $0x60] sm:$0xff]
    %v77 = vld [vmem:[#allocation5 + $0x68] sm:$0xff]
    %v78 = vld [vmem:[#allocation5 + $0x70] sm:$0xff]
    %v79 = vld [vmem:[#allocation5 + $0x78] sm:$0xff]
    %v80 = vld [vmem:[%s2] sm:$0x1]
    %v82 = vlaneseq
    %v83 = vshrl.u32 %v82, 7
    %v84 = vsub.s32 0, %v83
    %v85 = vrot.slane %v80, %v84
    %87 = vmatprep.subr.mxu0 0.0
    %88 = vmatpush1.msra.mxu0 %v79
    %89 = vmatprep.subr.mxu0 0.0
    %90 = vmatpush1.msra.mxu0 %v78
    %91 = vmatprep.subr.mxu0 0.0
    %92 = vmatpush1.msra.mxu0 %v77
    %93 = vmatprep.subr.mxu0 0.0
    %94 = vmatpush1.msra.mxu0 %v76
    %95 = vmatprep.subr.mxu0 0.0
    %96 = vmatpush1.msra.mxu0 %v75
    %97 = vmatprep.subr.mxu0 0.0
    %98 = vmatpush1.msra.mxu0 %v74
    %99 = vmatprep.subr.mxu0 0.0
    %100 = vmatpush1.msra.mxu0 %v73
    %101 = vmatprep.subr.mxu0 0.0
    %102 = vmatpush1.msra.mxu0 %v72
    %103 = vmatprep.subr.mxu0 0.0
    %104 = vmatpush1.msra.mxu0 %v71
    %105 = vmatprep.subr.mxu0 0.0
    %106 = vmatpush1.msra.mxu0 %v70
    %107 = vmatprep.subr.mxu0 0.0
    %108 = vmatpush1.msra.mxu0 %v69
    %109 = vmatprep.subr.mxu0 0.0
    %110 = vmatpush1.msra.mxu0 %v68
    %111 = vmatprep.subr.mxu0 0.0
    %112 = vmatpush1.msra.mxu0 %v67
    %113 = vmatprep.subr.mxu0 0.0
    %114 = vmatpush1.msra.mxu0 %v66
    %115 = vmatprep.subr.mxu0 0.0
    %116 = vmatpush1.msra.mxu0 %v65
    %117 = vmatprep.subr.mxu0 0.0
    %118 = vmatpush1.msra.mxu0 %v64
    %119 = vmatprep.subr.mxu0 0.0
    %120 = vmatpush2.msra.mxu0 0.0
    %121 = vmatprep.subr.mxu0 0.0
    %122 = vmatpush2.msra.mxu0 0.0
    %123 = vmatprep.subr.mxu0 0.0
    %124 = vmatpush2.msra.mxu0 0.0
    %125 = vmatprep.subr.mxu0 0.0
    %126 = vmatpush2.msra.mxu0 0.0
    %127 = vmatprep.subr.mxu0 0.0
    %128 = vmatpush2.msra.mxu0 0.0
    %129 = vmatprep.subr.mxu0 0.0
    %130 = vmatpush2.msra.mxu0 0.0
    %131 = vmatprep.subr.mxu0 0.0
    %132 = vmatpush2.msra.mxu0 0.0
    %133 = vmatprep.subr.mxu0 0.0
    %134 = vmatpush2.msra.mxu0 0.0
    %135 = vmatprep.subr.mxu0 0.0
    %136 = vmatpush2.msra.mxu0 0.0
    %137 = vmatprep.subr.mxu0 0.0
    %138 = vmatpush2.msra.mxu0 0.0
    %139 = vmatprep.subr.mxu0 0.0
    %140 = vmatpush2.msra.mxu0 0.0
    %141 = vmatprep.subr.mxu0 0.0
    %142 = vmatpush2.msra.mxu0 0.0
    %143 = vmatprep.subr.mxu0 0.0
    %144 = vmatpush2.msra.mxu0 0.0
    %145 = vmatprep.subr.mxu0 0.0
    %146 = vmatpush2.msra.mxu0 0.0
    %147 = vmatprep.subr.mxu0 0.0
    %148 = vmatpush2.msra.mxu0 0.0
    %149 = vmatprep.subr.mxu0 0.0
    %150 = vmatpush2.msra.mxu0 0.0
    %151 = vmatprep.mubr.f32.mxu0 0.0
    %152 = vmatmul.mubr.f32.gmra.mxu0 %v62
    %v153 = vpop.f32.mrf.mxu0
    %v154 = vadd.f32 %v85, %v153
    %v155 = vpop.f32.mrf.mxu0
    %156 = vmatprep.mubr.f32.mxu0 0.0
    %157 = vmatmul.mubr.f32.gmra.mxu0 %v63
    %v158 = vpop.f32.mrf.mxu0
    %v159 = vadd.f32 %v85, %v158
    %v160 = vpop.f32.mrf.mxu0
    %161 = vdwg.mxu0
    %v162 = vmul.f32 %v154, 0.5
    %v163 = vmul.f32 %v159, 0.5
    %v164 = vrcp.pop 1.4142135
    %v165 = vmul.f32 %v154, %v164
    %v166 = vmul.f32 %v159, %v164
    %v167 = verf.f32.pop %v165
    %v168 = verf.f32.pop %v166
    %v169 = vadd.f32 %v167, 1.0
    %v170 = vadd.f32 %v168, 1.0
    %v171 = vmul.f32 %v162, %v169
    %v172 = vmul.f32 %v163, %v170
    %v173 = vld [vmem:[#allocation7] sm:$0xff]
    %v174 = vld [vmem:[#allocation7 + $0x8] sm:$0xff]
    %v175 = vld [vmem:[#allocation7 + $0x10] sm:$0xff]
    %v176 = vld [vmem:[#allocation7 + $0x18] sm:$0xff]
    %v177 = vld [vmem:[#allocation7 + $0x20] sm:$0xff]
    %v178 = vld [vmem:[#allocation7 + $0x28] sm:$0xff]
    %v179 = vld [vmem:[#allocation7 + $0x30] sm:$0xff]
    %v180 = vld [vmem:[#allocation7 + $0x38] sm:$0xff]
    %v181 = vld [vmem:[#allocation7 + $0x40] sm:$0xff]
    %v182 = vld [vmem:[#allocation7 + $0x48] sm:$0xff]
    %v183 = vld [vmem:[#allocation7 + $0x50] sm:$0xff]
    %v184 = vld [vmem:[#allocation7 + $0x58] sm:$0xff]
    %v185 = vld [vmem:[#allocation7 + $0x60] sm:$0xff]
    %v186 = vld [vmem:[#allocation7 + $0x68] sm:$0xff]
    %v187 = vld [vmem:[#allocation7 + $0x70] sm:$0xff]
    %v188 = vld [vmem:[#allocation7 + $0x78] sm:$0xff]
    %v189 = vld [vmem:[%s4] sm:$0x1]
    %v191 = vlaneseq
    %v192 = vshrl.u32 %v191, 7
    %v193 = vsub.s32 0, %v192
    %v194 = vrot.slane %v189, %v193
    %196 = vmatprep.subr.mxu0 0.0
    %197 = vmatpush1.msra.mxu0 %v188
    %198 = vmatprep.subr.mxu0 0.0
    %199 = vmatpush1.msra.mxu0 %v187
    %200 = vmatprep.subr.mxu0 0.0
    %201 = vmatpush1.msra.mxu0 %v186
    %202 = vmatprep.subr.mxu0 0.0
    %203 = vmatpush1.msra.mxu0 %v185
    %204 = vmatprep.subr.mxu0 0.0
    %205 = vmatpush1.msra.mxu0 %v184
    %206 = vmatprep.subr.mxu0 0.0
    %207 = vmatpush1.msra.mxu0 %v183
    %208 = vmatprep.subr.mxu0 0.0
    %209 = vmatpush1.msra.mxu0 %v182
    %210 = vmatprep.subr.mxu0 0.0
    %211 = vmatpush1.msra.mxu0 %v181
    %212 = vmatprep.subr.mxu0 0.0
    %213 = vmatpush1.msra.mxu0 %v180
    %214 = vmatprep.subr.mxu0 0.0
    %215 = vmatpush1.msra.mxu0 %v179
    %216 = vmatprep.subr.mxu0 0.0
    %217 = vmatpush1.msra.mxu0 %v178
    %218 = vmatprep.subr.mxu0 0.0
    %219 = vmatpush1.msra.mxu0 %v177
    %220 = vmatprep.subr.mxu0 0.0
    %221 = vmatpush1.msra.mxu0 %v176
    %222 = vmatprep.subr.mxu0 0.0
    %223 = vmatpush1.msra.mxu0 %v175
    %224 = vmatprep.subr.mxu0 0.0
    %225 = vmatpush1.msra.mxu0 %v174
    %226 = vmatprep.subr.mxu0 0.0
    %227 = vmatpush1.msra.mxu0 %v173
    %228 = vmatprep.subr.mxu0 0.0
    %229 = vmatpush2.msra.mxu0 0.0
    %230 = vmatprep.subr.mxu0 0.0
    %231 = vmatpush2.msra.mxu0 0.0
    %232 = vmatprep.subr.mxu0 0.0
    %233 = vmatpush2.msra.mxu0 0.0
    %234 = vmatprep.subr.mxu0 0.0
    %235 = vmatpush2.msra.mxu0 0.0
    %236 = vmatprep.subr.mxu0 0.0
    %237 = vmatpush2.msra.mxu0 0.0
    %238 = vmatprep.subr.mxu0 0.0
    %239 = vmatpush2.msra.mxu0 0.0
    %240 = vmatprep.subr.mxu0 0.0
    %241 = vmatpush2.msra.mxu0 0.0
    %242 = vmatprep.subr.mxu0 0.0
    %243 = vmatpush2.msra.mxu0 0.0
    %244 = vmatprep.subr.mxu0 0.0
    %245 = vmatpush2.msra.mxu0 0.0
    %246 = vmatprep.subr.mxu0 0.0
    %247 = vmatpush2.msra.mxu0 0.0
    %248 = vmatprep.subr.mxu0 0.0
    %249 = vmatpush2.msra.mxu0 0.0
    %250 = vmatprep.subr.mxu0 0.0
    %251 = vmatpush2.msra.mxu0 0.0
    %252 = vmatprep.subr.mxu0 0.0
    %253 = vmatpush2.msra.mxu0 0.0
    %254 = vmatprep.subr.mxu0 0.0
    %255 = vmatpush2.msra.mxu0 0.0
    %256 = vmatprep.subr.mxu0 0.0
    %257 = vmatpush2.msra.mxu0 0.0
    %258 = vmatprep.subr.mxu0 0.0
    %259 = vmatpush2.msra.mxu0 0.0
    %260 = vmatprep.mubr.f32.mxu0 0.0
    %261 = vmatmul.mubr.f32.gmra.mxu0 %v171
    %v262 = vpop.f32.mrf.mxu0
    %v263 = vadd.f32 %v194, %v262
    %v264 = vpop.f32.mrf.mxu0
    %265 = vmatprep.mubr.f32.mxu0 0.0
    %266 = vmatmul.mubr.f32.gmra.mxu0 %v172
    %v267 = vpop.f32.mrf.mxu0
    %v268 = vadd.f32 %v194, %v267
    %v269 = vpop.f32.mrf.mxu0
    %270 = vdwg.mxu0
    %271 = vst [vmem:[#allocation8] sm:$0xff] %v263
    %272 = vst [vmem:[#allocation8 + $0x8] sm:$0xff] %v268
    // Predicated region
    $region34: #{tpu_custom_call.1} parent=1 // pred_check
      _
    $region35: #{tpu_custom_call.1} parent=1 // pred_check_branch
      %274 = sbr.rel (0) target = $region37
    $region36: #{tpu_custom_call.1} parent=1 // pred_region
      %s276 = ssub.s32 256, 256
      %277 = vsyncadd [#allocation4], %s276
      %s278 = sshll.u32 [#allocation8], 4
      %s279 = int_to_ptr.vmem [resolvable:$true] %s278
      %284 = dma.vmem_to_hbm [thread:$0]  %s279, 256, %s5, [#allocation4], 128, 128, 8
    $region37: #{tpu_custom_call.1} parent=1 // pred_fallthru
      _
    // Predicated region
    $region38: #{tpu_custom_call.1} parent=1 // pred_check
      _
    $region39: #{tpu_custom_call.1} parent=1 // pred_check_branch
      %286 = sbr.rel (0) target = $region41
    $region40: #{tpu_custom_call.1} parent=1 // pred_region
      %287 = dma.done [#allocation4], 256
    $region41: #{tpu_custom_call.1} parent=1 // pred_fallthru
      _
    %288 = vsyncpa [#allocation3], 1
    %289 = vsyncpa [#allocation6], 1
    %290 = vsyncpa [#allocation4], 1

</llo_original>
